<compile_context>
chip_gen: v5e
topology: v5e:2x2
jax: 0.10.0
libtpu: 0.0.40
codegen_flags: <defaults>
</compile_context>

<pallas_src>
import math
import functools

import jax
import jax.numpy as jnp
from jax.experimental import pallas as pl
from jax.experimental.pallas import tpu as pltpu


# ---------------------------------------------------------------------------
# Kernels
# ---------------------------------------------------------------------------
def _pe_add_kernel(x_ref, pe_ref, o_ref, *, batch):
    pe = pe_ref[...]                                      # (ts, D)
    if batch > 1:
        pe = jnp.concatenate([pe] * batch, axis=-1)       # lane-tile -> (ts, B*D)
    o_ref[...] = x_ref[...] + pe


def _pe_add_dropout_kernel(x_ref, pe_ref, mask_ref, o_ref, *, batch):
    pe = pe_ref[...]                                      # (ts, D)
    if batch > 1:
        pe = jnp.concatenate([pe] * batch, axis=-1)       # lane-tile -> (ts, B*D)
    # mask already holds {0, 1/(1-p)} in x.dtype -> single multiply.
    o_ref[...] = (x_ref[...] + pe) * mask_ref[...]


# ---------------------------------------------------------------------------
# Parameter setup (matches the PyTorch __init__ buffer `pe`)
# ---------------------------------------------------------------------------
def make_positional_encoding_table(d_model, max_len, dtype=jnp.float32):
    position = jnp.arange(max_len, dtype=jnp.float32)[:, None]        # (max_len, 1)
    div_term = jnp.exp(
        jnp.arange(0, d_model, 2, dtype=jnp.float32) * (-math.log(10000.0) / d_model)
    )
    pe = jnp.zeros((max_len, 1, d_model), dtype=jnp.float32)
    pe = pe.at[:, 0, 0::2].set(jnp.sin(position * div_term))
    pe = pe.at[:, 0, 1::2].set(jnp.cos(position * div_term))
    return pe.astype(dtype)


# ---------------------------------------------------------------------------
# Wrapper
# ---------------------------------------------------------------------------
def _pick_row_tile(seq_len, row_bytes, target_bytes=1 << 20):
    """Rows per tile: ~1 MiB per streamed buffer, multiple of 8 sublanes."""
    ts = max(1, target_bytes // max(row_bytes, 1))
    if ts >= seq_len:
        return seq_len
    return max(8, (ts // 8) * 8)


def positional_encoding_forward(x, pe, *, dropout_p=0.1, training=True, rng_key=None):
    """x: (seq_len, batch, d_model); pe: (max_len, 1, d_model)."""
    S, B, D = x.shape
    assert pe.shape[0] >= S and pe.shape[-1] == D
    BD = B * D

    x2 = x.reshape(S, BD)                      # free reshape (collapse trailing dims)
    pe2 = pe[:S, 0, :].astype(x.dtype)         # (S, D), shipped in x.dtype

    itemsize = jnp.dtype(x.dtype).itemsize
    ts = _pick_row_tile(S, BD * itemsize)
    grid = (pl.cdiv(S, ts),)

    x_spec = pl.BlockSpec((ts, BD), lambda i: (i, 0))
    pe_spec = pl.BlockSpec((ts, D), lambda i: (i, 0))

    cparams = pltpu.CompilerParams(
        dimension_semantics=("parallel",),       # shard stream across TCs on v7x
        vmem_limit_bytes=32 * 1024 * 1024,       # safe on v5e/v6e/v7x
    )

    apply_dropout = training and float(dropout_p) > 0.0
    if apply_dropout:
        # TODO(synk): in-kernel pltpu.prng_seed/prng_random_bits would avoid the
        # extra HBM read of the mask, but has no CPU/interpret lowering; the
        # keep/scale mask is generated in the wrapper (same distribution as
        # torch.nn.Dropout, not the same RNG stream).
        if rng_key is None:
            rng_key = jax.random.PRNGKey(0)
        keep = jax.random.bernoulli(rng_key, 1.0 - float(dropout_p), (S, BD))
        mask = keep.astype(x.dtype) * jnp.asarray(
            1.0 / (1.0 - float(dropout_p)), dtype=x.dtype
        )
        kernel = functools.partial(_pe_add_dropout_kernel, batch=B)
        in_specs = [x_spec, pe_spec, x_spec]
        operands = (x2, pe2, mask)
    else:
        kernel = functools.partial(_pe_add_kernel, batch=B)
        in_specs = [x_spec, pe_spec]
        operands = (x2, pe2)

    y2 = pl.pallas_call(
        kernel,
        out_shape=jax.ShapeDtypeStruct((S, BD), x.dtype),
        grid=grid,
        in_specs=in_specs,
        out_specs=x_spec,
        compiler_params=cparams,
    )(*operands)
    return y2.reshape(S, B, D)


# ---------------------------------------------------------------------------
# Demo / check
# ---------------------------------------------------------------------------
if __name__ == "__main__":
    d_model = 32
    max_len = 16
    seq_len = 8
    batch = 2
    dropout_p = 0.1

    key = jax.random.PRNGKey(0)
    kx, kd = jax.random.split(key)
    x = jax.random.normal(kx, (seq_len, batch, d_model), dtype=jnp.float32)
    pe = make_positional_encoding_table(d_model, max_len, dtype=x.dtype)

    # Eval mode (dropout is identity) -> deterministic, check against reference.
    y_eval = positional_encoding_forward(x, pe, dropout_p=dropout_p, training=False)
    y_eval = jax.block_until_ready(y_eval)
    ref = x + pe[:seq_len]                     # broadcasts (S,1,D) over batch
    assert y_eval.shape == (seq_len, batch, d_model)
    assert jnp.allclose(y_eval, ref, atol=1e-6, rtol=1e-6), "mismatch vs reference"

    # Training mode (exercises the dropout path).
    y_train = positional_encoding_forward(
        x, pe, dropout_p=dropout_p, training=True, rng_key=kd
    )
    y_train = jax.block_until_ready(y_train)
    assert y_train.shape == (seq_len, batch, d_model)
    scaled_ref = ref / (1.0 - dropout_p)
    ok = jnp.logical_or(
        jnp.isclose(y_train, 0.0, atol=1e-6),
        jnp.isclose(y_train, scaled_ref, atol=1e-5, rtol=1e-5),
    )
    assert bool(jnp.all(ok)), "dropout output values inconsistent"

    print("KERNEL_OK")
</pallas_src>

<mosaic_0001>
module attributes {stable_mosaic.version = 11 : i64} {
  func.func @_pe_add_kernel(%arg0: i32, %arg1: memref<8x64xf32, #tpu.memory_space<vmem>>, %arg2: memref<8x32xf32, #tpu.memory_space<vmem>>, %arg3: memref<8x64xf32, #tpu.memory_space<vmem>>) attributes {dimension_semantics = [#tpu.dimension_semantics<parallel>], iteration_bounds = array<i64: 1>, scalar_prefetch = 0 : i64, scratch_operands = 0 : i64, tpu.core_type = #tpu.core_type<tc>, window_params = [{transform_indices = @transform_0, window_bounds = array<i64: 8, 64>}, {transform_indices = @transform_1, window_bounds = array<i64: 8, 32>}, {transform_indices = @transform_2, window_bounds = array<i64: 8, 64>}]} {
    %c0 = arith.constant 0 : index
    %c0_0 = arith.constant 0 : index
    %0 = vector.load %arg2[%c0, %c0_0] : memref<8x32xf32, #tpu.memory_space<vmem>>, vector<8x32xf32>
    %1 = tpu.concatenate %0, %0 in 1 : vector<8x32xf32>, vector<8x32xf32> -> vector<8x64xf32>
    %c0_1 = arith.constant 0 : index
    %c0_2 = arith.constant 0 : index
    %2 = vector.load %arg1[%c0_1, %c0_2] : memref<8x64xf32, #tpu.memory_space<vmem>>, vector<8x64xf32>
    %3 = arith.addf %2, %1 : vector<8x64xf32>
    %c0_3 = arith.constant 0 : index
    %c0_4 = arith.constant 0 : index
    %4 = vector.load %arg3[%c0_3, %c0_4] : memref<8x64xf32, #tpu.memory_space<vmem>>, vector<8x64xf32>
    tpu.vector_store %arg3[%c0_3, %c0_4], %3 {strides = array<i32>} : memref<8x64xf32, #tpu.memory_space<vmem>>, vector<8x64xf32>,
    return
  }
  func.func @transform_0(%arg0: i32) -> (i32, i32) {
    %c0_i32 = arith.constant 0 : i32
    %c0_i32_0 = arith.constant 0 : i32
    return %arg0, %c0_i32 : i32, i32
  }
  func.func @transform_1(%arg0: i32) -> (i32, i32) {
    %c0_i32 = arith.constant 0 : i32
    %c0_i32_0 = arith.constant 0 : i32
    return %arg0, %c0_i32 : i32, i32
  }
  func.func @transform_2(%arg0: i32) -> (i32, i32) {
    %c0_i32 = arith.constant 0 : i32
    %c0_i32_0 = arith.constant 0 : i32
    return %arg0, %c0_i32 : i32, i32
  }
}

</mosaic_0001>

<llo_original>
// kernel: tpu_custom_call.1
$region0: #{tpu_custom_call.1}
  #allocation0 [shape = 'u32[]', space=smem, size = 0x4, offset = 0x4, fixed_abs, tag = 'smem constant byte address 0x4 - core index']
  #allocation1 [shape = 'u32[72,128]{1,0:T(1,128)}', space=vmem, size = 0x9000, scoped, tag = 'internal scratch']
  %s0 = inlined_call_operand.hbm [shape: f32[8,64], index: 0, kind: input, shape index: {}]
  %s1 = inlined_call_operand.hbm [shape: f32[8,32], index: 1, kind: input, shape index: {}]
  %s2 = inlined_call_operand.hbm [shape: f32[8,64], index: 2, kind: output, shape index: {}]
  %s3 = sld [smem:[#allocation0]]
  $region26: #{tpu_custom_call.1} parent=0
    _
  %s5 = ssub.s32 1, %s3
  %s6 = scalar_select 0, %s5, %s3
  $region1: #{tpu_custom_call.1} parent=0
    #allocation2 [shape = 'u8[4096]{0}', space=vmem, size = 0x1000, scoped, tag = 'input window, operand 0, single buffered']
    #allocation3 [shape = 's32[1]{0}', space=sflag, size = 0x4, scoped, tag = 'scoped memory for tpu_custom_call.1']
    #allocation4 [shape = 's32[1]{0}', space=sflag, size = 0x4, scoped, tag = 'scoped memory for tpu_custom_call.1']
    #allocation5 [shape = 'u8[4096]{0}', space=vmem, size = 0x1000, scoped, tag = 'input window, operand 1, single buffered']
    #allocation6 [shape = 's32[1]{0}', space=sflag, size = 0x4, scoped, tag = 'scoped memory for tpu_custom_call.1']
    #allocation7 [shape = 'u8[4096]{0}', space=vmem, size = 0x1000, scoped, tag = 'output window, operand 0, single buffered']
    %7 = vsyncpa [#allocation3], 0
    %8 = vsyncpa [#allocation6], 0
    %9 = vsyncpa [#allocation4], 0
    // Predicated region
    $region2: #{tpu_custom_call.1} parent=1 // pred_check
      _
    $region3: #{tpu_custom_call.1} parent=1 // pred_check_branch
      %11 = sbr.rel (0) target = $region5
    $region4: #{tpu_custom_call.1} parent=1 // pred_region
      %13 = vsyncadd [#allocation3], 0
      %s15 = sshll.u32 %s0, 4
      %s16 = int_to_ptr.hbm [resolvable:$true] %s15
      %s17 = sshll.u32 [#allocation2], 4
      %s18 = int_to_ptr.vmem [resolvable:$true] %s17
      %20 = dma.hbm_to_vmem [thread:$0]  %s16, 128, %s18, [#allocation3]
    $region5: #{tpu_custom_call.1} parent=1 // pred_fallthru
      _
    // Predicated region
    $region6: #{tpu_custom_call.1} parent=1 // pred_check
      _
    $region7: #{tpu_custom_call.1} parent=1 // pred_check_branch
      %22 = sbr.rel (0) target = $region9
    $region8: #{tpu_custom_call.1} parent=1 // pred_region
      %24 = vsyncadd [#allocation6], 0
      %s26 = sshll.u32 %s1, 4
      %s27 = int_to_ptr.hbm [resolvable:$true] %s26
      %s28 = sshll.u32 [#allocation5], 4
      %s29 = int_to_ptr.vmem [resolvable:$true] %s28
      %31 = dma.hbm_to_vmem [thread:$0]  %s27, 128, %s29, [#allocation6]
    $region9: #{tpu_custom_call.1} parent=1 // pred_fallthru
      _
    // Predicated region
    $region10: #{tpu_custom_call.1} parent=1 // pred_check
      _
    $region11: #{tpu_custom_call.1} parent=1 // pred_check_branch
      %33 = sbr.rel (0) target = $region13
    $region12: #{tpu_custom_call.1} parent=1 // pred_region
      %35 = dma.done [#allocation3], 128
    $region13: #{tpu_custom_call.1} parent=1 // pred_fallthru
      _
    // Predicated region
    $region14: #{tpu_custom_call.1} parent=1 // pred_check
      _
    $region15: #{tpu_custom_call.1} parent=1 // pred_check_branch
      %37 = sbr.rel (0) target = $region17
    $region16: #{tpu_custom_call.1} parent=1 // pred_region
      %39 = dma.done [#allocation6], 128
    $region17: #{tpu_custom_call.1} parent=1 // pred_fallthru
      _
    %v40 = vld [vmem:[#allocation5] sm:$0xff]
    %42 = vrot.lane.b32.xlu0 %v40, 32
    %v43 = vpop.permute.xlu0 %42
    %vm45 = vcmask 261120
    %v46 = vsel %vm45, %v40, %v43
    %v47 = vld [vmem:[#allocation2] sm:$0xff]
    %v48 = vadd.f32 %v47, %v46
    %vm49 = vcmask 523264
    %50 = vst.msk [vmem:[#allocation7] sm:$0xff] %vm49, %v48
    // Predicated region
    $region18: #{tpu_custom_call.1} parent=1 // pred_check
      _
    $region19: #{tpu_custom_call.1} parent=1 // pred_check_branch
      %52 = sbr.rel (0) target = $region21
    $region20: #{tpu_custom_call.1} parent=1 // pred_region
      %54 = vsyncadd [#allocation4], 0
      %s56 = sshll.u32 [#allocation7], 4
      %s57 = int_to_ptr.vmem [resolvable:$true] %s56
      %s58 = sshll.u32 %s2, 4
      %s59 = int_to_ptr.hbm [resolvable:$true] %s58
      %61 = dma.vmem_to_hbm [thread:$0]  %s57, 128, %s59, [#allocation4]
    $region21: #{tpu_custom_call.1} parent=1 // pred_fallthru
      _
    // Predicated region
    $region22: #{tpu_custom_call.1} parent=1 // pred_check
      _
    $region23: #{tpu_custom_call.1} parent=1 // pred_check_branch
      %63 = sbr.rel (0) target = $region25
    $region24: #{tpu_custom_call.1} parent=1 // pred_region
      %65 = dma.done [#allocation4], 128
    $region25: #{tpu_custom_call.1} parent=1 // pred_fallthru
      _
    %66 = vsyncpa [#allocation3], 1
    %67 = vsyncpa [#allocation6], 1
    %68 = vsyncpa [#allocation4], 1

</llo_original>
